<compile_context>
chip_gen: v6e
topology: v6e:2x2x1
jax: 0.10.0
libtpu: 0.0.40
codegen_flags: <defaults>
</compile_context>

<pallas_src>
import jax
import jax.numpy as jnp
from jax.experimental import pallas as pl
from jax.experimental.pallas import tpu as pltpu

# ----------------------------- configuration --------------------------------
B, V, H, W = 2, 3, 16, 16      # batch, num views, feature-map spatial size
C = 16                         # stage feature channels
G = 8                          # group_nums[stage_id]
CG = C // G                    # channels per group
DNUM = 4                       # depth hypotheses per pixel (binary tree)
HW = H * W
S = V - 1                      # number of source views
SDHW = S * DNUM * HW           # lanes per batch for the fused sim/weight pass
DHW = DNUM * HW


def _full_spec(shape):
    nd = len(shape)
    return pl.BlockSpec(shape, lambda i, _nd=nd: (0,) * _nd)


# ------------- Kernel A: per-view stage feature extractor (stand-in) --------
# TODO(synk): StageFeatExtNet is an external multi-stage FPN not present in the
# given source; replaced by a deterministic 1x1 conv (3->C) + ReLU.
def feat_kernel(x_ref, w_ref, b_ref, o_ref):
    o_ref[...] = jnp.maximum(
        jnp.dot(w_ref[...], x_ref[...], preferred_element_type=jnp.float32)
        + b_ref[...], 0.0)


def extract_features(imgs, wf, bf):
    # imgs: (B, V, 3, H, W) -> list of V feature maps (B, C, H, W)
    x = jnp.transpose(imgs, (2, 0, 1, 3, 4)).reshape(3, B * V * HW)
    n = x.shape[1]
    tn = 512                           # wider tile: fewer grid steps (item 3)
    out = pl.pallas_call(
        feat_kernel,
        grid=(n // tn,),
        in_specs=[pl.BlockSpec((3, tn), lambda i: (0, i)),
                  pl.BlockSpec((C, 3), lambda i: (0, 0)),
                  pl.BlockSpec((C, 1), lambda i: (0, 0))],
        out_specs=pl.BlockSpec((C, tn), lambda i: (0, i)),
        out_shape=jax.ShapeDtypeStruct((C, n), jnp.float32),
        compiler_params=pltpu.CompilerParams(dimension_semantics=("parallel",)),
    )(x, wf, bf)
    out = out.reshape(C, B, V, H, W).transpose(1, 2, 0, 3, 4)  # (B, V, C, H, W)
    return [out[:, v] for v in range(V)]


# ------- Kernel B: fused group similarity + PixelwiseNet + aggregation ------
# Implements the hot path of GBiNet.sequential_wrapping:
#   sim_v = mean_cg(warped_v * ref),  w_v = max_d sigmoid(PixelwiseNet(sim_v))
#   out   = sum_v(sim_v * w_v) / sum_v(w_v)
# PixelwiseNet = 1x1x1 conv G->16->8->1 (+ReLU), sigmoid, max over depth dim.
# (BatchNorm folded to identity: eval mode with default running stats.)
# The whole (s, d) extent is folded onto the lane axis so the 3-layer conv
# chain runs as 3 matmuls of width S*D*HW per batch element.
def seqwrap_kernel(ref_ref, warp_ref, w1_ref, b1_ref, w2_ref, b2_ref,
                   w3_ref, b3_ref, out_ref):
    ref = ref_ref[0]                                     # (CG, G, S*D*HW) f32
    warped = warp_ref[0].astype(jnp.float32)             # (CG, G, S*D*HW)
    sim = jnp.mean(warped * ref, axis=0)                 # (G,  S*D*HW)

    # Batched PixelwiseNet over all (s, d, hw) at once (f32 accumulation).
    h = jnp.maximum(
        jnp.dot(w1_ref[...], sim, preferred_element_type=jnp.float32)
        + b1_ref[...], 0.0)                              # (16, N)
    h = jnp.maximum(
        jnp.dot(w2_ref[...], h, preferred_element_type=jnp.float32)
        + b2_ref[...], 0.0)                              # (8, N)
    v = jax.nn.sigmoid(
        jnp.dot(w3_ref[...], h, preferred_element_type=jnp.float32)
        + b3_ref[...])                                   # (1, N)

    # Per-source pixel weight = max over depth (vreg-aligned lane slices).
    vws = []
    for s in range(S):
        vw = v[:, (s * DNUM) * HW:(s * DNUM + 1) * HW]   # (1, HW)
        for d in range(1, DNUM):
            off = (s * DNUM + d) * HW
            vw = jnp.maximum(vw, v[:, off:off + HW])
        vws.append(vw)
    w_sum = vws[0]
    for s in range(1, S):
        w_sum = w_sum + vws[s]
    inv_w = pl.reciprocal(w_sum, approx=True)            # EUP reciprocal

    # Weighted aggregation over sources, normalized; one lane-dense store.
    chunks = []
    for d in range(DNUM):
        acc = jnp.zeros((G, HW), jnp.float32)
        for s in range(S):
            off = (s * DNUM + d) * HW
            acc = acc + sim[:, off:off + HW] * vws[s]
        chunks.append(acc * inv_w)                       # (G, HW)
    out_ref[0] = jnp.concatenate(chunks, axis=1)         # (G, D*HW)


# --------- Kernel C: cost regularization (stand-in) + prediction head -------
# TODO(synk): CostRegNetBN is an external 3D U-Net (not in the given source);
# stand-in = 1x1x1 conv chain G->8->1 with ReLU, then squeeze(channel).
# Head reproduces: pred_label = argmax_D, pred_prob = max_D softmax_D.
# The D axis is folded onto lanes so the conv chain is 2 matmuls of width D*HW.
def costreg_head_kernel(agg_ref, cw1_ref, cb1_ref, cw2_ref, cb2_ref,
                        feat_ref, label_ref, prob_ref):
    x = agg_ref[0]                                       # (G, D*HW)
    h = jnp.maximum(
        jnp.dot(cw1_ref[...], x, preferred_element_type=jnp.float32)
        + cb1_ref[...], 0.0)                             # (8, D*HW)
    f = jnp.dot(cw2_ref[...], h, preferred_element_type=jnp.float32) \
        + cb2_ref[...]                                   # (1, D*HW)
    feat_ref[0] = f

    # argmax / max-softmax over the depth lane-chunks.
    m = f[:, 0:HW]
    idx = jnp.zeros((1, HW), jnp.int32)
    for d in range(1, DNUM):
        cur = f[:, d * HW:(d + 1) * HW]
        better = cur > m
        m = jnp.where(better, cur, m)
        idx = jnp.where(better, jnp.full_like(idx, d), idx)
    denom = jnp.zeros((1, HW), jnp.float32)
    for d in range(DNUM):
        denom = denom + jnp.exp(f[:, d * HW:(d + 1) * HW] - m)
    label_ref[0] = idx
    prob_ref[0] = pl.reciprocal(denom, approx=True)      # max of softmax


# ------------------------------ JAX glue -------------------------------------
def get_pixel_grids(h, w):
    x = jnp.arange(w, dtype=jnp.float32) + 0.5
    y = jnp.arange(h, dtype=jnp.float32) + 0.5
    xg, yg = jnp.meshgrid(x, y, indexing='xy')
    return jnp.stack([xg, yg, jnp.ones_like(xg)], axis=0)    # (3, h, w)


def feature_fetcher(src_fea, world_points, K, E):
    # src_fea: (B,1,C,H,W), world_points: (B,3,N), K: (B,1,3,3), E: (B,1,3,4)
    # JAX stand-in for FeatureFetcher (project + bilinear grid_sample w/ zero pad).
    # TODO(synk): data-dependent bilinear gather kept in XLA; fuse into Kernel B
    # via scalar-prefetched indices at production resolutions.
    Bn, Vn, Cn, Hn, Wn = src_fea.shape
    R = E[:, :, :3, :3]
    t = E[:, :, :3, 3:4]
    cam_pts = jnp.matmul(R, world_points[:, None]) + t       # (B,1,3,N)
    proj = jnp.matmul(K, cam_pts)
    z = proj[:, :, 2, :]
    z = jnp.where(jnp.abs(z) < 1e-6, 1e-6, z)
    px = proj[:, :, 0, :] / z - 0.5                          # pixel-center -> index coords
    py = proj[:, :, 1, :] / z - 0.5
    x0 = jnp.floor(px); y0 = jnp.floor(py)
    x1 = x0 + 1.0;      y1 = y0 + 1.0
    wx1 = px - x0; wx0 = 1.0 - wx1
    wy1 = py - y0; wy0 = 1.0 - wy1
    fea_flat = src_fea.reshape(Bn, Vn, Cn, Hn * Wn)

    def gather(xi, yi):
        valid = ((xi >= 0) & (xi <= Wn - 1) & (yi >= 0) & (yi <= Hn - 1))
        xc = jnp.clip(xi, 0, Wn - 1).astype(jnp.int32)
        yc = jnp.clip(yi, 0, Hn - 1).astype(jnp.int32)
        flat = yc * Wn + xc                                  # (B,1,N)
        idx = jnp.broadcast_to(flat[:, :, None, :],
                               (Bn, Vn, Cn, flat.shape[-1]))
        vals = jnp.take_along_axis(fea_flat, idx, axis=3)    # (B,1,C,N)
        return vals, valid[:, :, None, :].astype(jnp.float32)

    v00, m00 = gather(x0, y0)
    v01, m01 = gather(x1, y0)
    v10, m10 = gather(x0, y1)
    v11, m11 = gather(x1, y1)
    wexp = lambda a: a[:, :, None, :]
    out = (v00 * wexp(wx0 * wy0) * m00 + v01 * wexp(wx1 * wy0) * m01 +
           v10 * wexp(wx0 * wy1) * m10 + v11 * wexp(wx1 * wy1) * m11)
    return out                                               # (B,1,C,N)


def sequential_wrapping(features, current_depths, grid3, cam_K, cam_E, params):
    ref_feature = features[0]                                # (B, C, H, W)
    # ref in (B, CG, G, HW), tiled S*D times along lanes so the kernel needs
    # no in-kernel broadcast/relayout.
    ref_g = ref_feature.reshape(B, G, CG, HW)
    ref_t = jnp.transpose(ref_g, (0, 2, 1, 3))               # (B, CG, G, HW)
    ref_tiled = jnp.tile(ref_t, (1, 1, 1, S * DNUM))         # (B, CG, G, S*D*HW)

    ref_K = cam_K[:, 0]                                      # (B,3,3)
    R = cam_E[:, :, :3, :3]
    t = cam_E[:, :, :3, 3][..., None]                        # (B,V,3,1)
    R_inv = jnp.linalg.inv(R)
    uv = jnp.matmul(jnp.linalg.inv(ref_K)[:, None], grid3)   # (B,1,3,HW)
    cam_points = uv * current_depths.reshape(B, DNUM, 1, HW)            # (B,D,3,HW)
    world_points = jnp.matmul(R_inv[:, 0:1], cam_points - t[:, 0:1])    # (B,D,3,HW)
    world_points = world_points.transpose(0, 2, 1, 3).reshape(B, 3, -1) # (B,3,D*HW)

    warped_list = []
    for src_idx in range(1, V):
        src_fea = features[src_idx][:, None]                 # (B,1,C,H,W)
        wv = feature_fetcher(src_fea, world_points,
                             cam_K[:, src_idx:src_idx + 1],
                             cam_E[:, src_idx:src_idx + 1])
        wv = wv[:, 0].reshape(B, G, CG, DHW)                 # lane = d*HW + hw
        wv = jnp.transpose(wv, (0, 2, 1, 3))                 # (B, CG, G, D*HW)
        warped_list.append(wv.astype(jnp.bfloat16))          # stream bf16
    warped = jnp.stack(warped_list, axis=3)                  # (B, CG, G, S, D*HW)
    warped = warped.reshape(B, CG, G, SDHW)

    agg = pl.pallas_call(
        seqwrap_kernel,
        grid=(B,),
        in_specs=[pl.BlockSpec((1, CG, G, SDHW), lambda b: (b, 0, 0, 0)),
                  pl.BlockSpec((1, CG, G, SDHW), lambda b: (b, 0, 0, 0)),
                  _full_spec(params['pw_w1'].shape), _full_spec(params['pw_b1'].shape),
                  _full_spec(params['pw_w2'].shape), _full_spec(params['pw_b2'].shape),
                  _full_spec(params['pw_w3'].shape), _full_spec(params['pw_b3'].shape)],
        out_specs=pl.BlockSpec((1, G, DHW), lambda b: (b, 0, 0)),
        out_shape=jax.ShapeDtypeStruct((B, G, DHW), jnp.float32),
        compiler_params=pltpu.CompilerParams(dimension_semantics=("parallel",)),
    )(ref_tiled, warped, params['pw_w1'], params['pw_b1'],
      params['pw_w2'], params['pw_b2'], params['pw_w3'], params['pw_b3'])
    return agg                                               # (B, G, D*HW)


def cost_and_head(cost_img, params):
    feat, label, prob = pl.pallas_call(
        costreg_head_kernel,
        grid=(B,),
        in_specs=[pl.BlockSpec((1, G, DHW), lambda b: (b, 0, 0)),
                  _full_spec(params['cr_w1'].shape), _full_spec(params['cr_b1'].shape),
                  _full_spec(params['cr_w2'].shape), _full_spec(params['cr_b2'].shape)],
        out_specs=(pl.BlockSpec((1, 1, DHW), lambda b: (b, 0, 0)),
                   pl.BlockSpec((1, 1, HW), lambda b: (b, 0, 0)),
                   pl.BlockSpec((1, 1, HW), lambda b: (b, 0, 0))),
        out_shape=(jax.ShapeDtypeStruct((B, 1, DHW), jnp.float32),
                   jax.ShapeDtypeStruct((B, 1, HW), jnp.int32),
                   jax.ShapeDtypeStruct((B, 1, HW), jnp.float32)),
        compiler_params=pltpu.CompilerParams(dimension_semantics=("parallel",)),
    )(cost_img, params['cr_w1'], params['cr_b1'],
      params['cr_w2'], params['cr_b2'])
    return feat, label, prob


def forward_one_depth(data_batch, params):
    imgs = data_batch['imgs']
    cams = data_batch['cams']
    cam_extrinsic = cams[:, :, 0, :3, :4]
    cam_intrinsic = cams[:, :, 1, :3, :3]
    features = extract_features(imgs, params['feat_w'], params['feat_b'])
    current_depths = data_batch['binary_tree_depth']
    grid3 = get_pixel_grids(H, W).reshape(1, 1, 3, HW)
    grid3 = jnp.broadcast_to(grid3, (B, 1, 3, HW))
    cost_img = sequential_wrapping(features, current_depths, grid3,
                                   cam_intrinsic, cam_extrinsic, params)
    pred_feature, pred_label, pred_prob = cost_and_head(cost_img, params)
    return {'pred_feature': pred_feature.reshape(B, DNUM, H, W),
            'pred_label': pred_label.reshape(B, H, W),
            'pred_prob': pred_prob.reshape(B, H, W)}


def init_params(key):
    ks = jax.random.split(key, 8)
    p = {}
    p['feat_w'] = 0.3 * jax.random.normal(ks[0], (C, 3), jnp.float32)
    p['feat_b'] = 0.1 * jax.random.normal(ks[1], (C, 1), jnp.float32)
    # PixelwiseNet(G): 1x1x1 conv chain G->16->8->1 (BN folded to identity, eval).
    p['pw_w1'] = 0.3 * jax.random.normal(ks[2], (16, G), jnp.float32)
    p['pw_b1'] = jnp.zeros((16, 1), jnp.float32)
    p['pw_w2'] = 0.3 * jax.random.normal(ks[3], (8, 16), jnp.float32)
    p['pw_b2'] = jnp.zeros((8, 1), jnp.float32)
    p['pw_w3'] = 0.3 * jax.random.normal(ks[4], (1, 8), jnp.float32)
    p['pw_b3'] = jnp.zeros((1, 1), jnp.float32)
    # CostRegNetBN stand-in: 1x1x1 conv chain G->8->1.
    p['cr_w1'] = 0.3 * jax.random.normal(ks[5], (8, G), jnp.float32)
    p['cr_b1'] = 0.1 * jax.random.normal(ks[6], (8, 1), jnp.float32)
    p['cr_w2'] = 0.3 * jax.random.normal(ks[7], (1, 8), jnp.float32)
    p['cr_b2'] = jnp.zeros((1, 1), jnp.float32)
    return p


if __name__ == "__main__":
    key = jax.random.PRNGKey(0)
    kp, ki, kd = jax.random.split(key, 3)
    params = init_params(kp)

    imgs = jax.random.normal(ki, (B, V, 3, H, W), jnp.float32)

    # cams: (B, V, 2, 4, 4) -- [:, :, 0] extrinsic [R|t], [:, :, 1] intrinsic K
    Kmat = jnp.array([[20.0, 0.0, 8.0], [0.0, 20.0, 8.0], [0.0, 0.0, 1.0]],
                     jnp.float32)
    cams = jnp.zeros((B, V, 2, 4, 4), jnp.float32)
    for v, tx in enumerate([0.0, 0.25, -0.25]):
        E4 = jnp.eye(4, dtype=jnp.float32).at[0, 3].set(tx)
        K4 = jnp.zeros((4, 4), jnp.float32).at[:3, :3].set(Kmat).at[3, 3].set(1.0)
        cams = cams.at[:, v, 0].set(E4)
        cams = cams.at[:, v, 1].set(K4)

    base_depths = jnp.linspace(1.5, 3.0, DNUM, dtype=jnp.float32)
    binary_tree_depth = (base_depths[None, :, None, None]
                         + 0.05 * jax.random.uniform(kd, (B, DNUM, H, W)))

    data_batch = {'imgs': imgs, 'cams': cams,
                  'binary_tree_depth': binary_tree_depth}

    out = forward_one_depth(data_batch, params)
    jax.block_until_ready(out['pred_feature'])
    jax.block_until_ready(out['pred_label'])
    jax.block_until_ready(out['pred_prob'])
    assert out['pred_feature'].shape == (B, DNUM, H, W)
    assert out['pred_label'].shape == (B, H, W)
    assert out['pred_prob'].shape == (B, H, W)
    print("KERNEL_OK")
</pallas_src>

<mosaic_0001>
module attributes {stable_mosaic.version = 11 : i64} {
  func.func @feat_kernel(%arg0: i32, %arg1: memref<3x512xf32, #tpu.memory_space<vmem>>, %arg2: memref<16x3xf32, #tpu.memory_space<vmem>>, %arg3: memref<16x1xf32, #tpu.memory_space<vmem>>, %arg4: memref<16x512xf32, #tpu.memory_space<vmem>>) attributes {dimension_semantics = [#tpu.dimension_semantics<parallel>], iteration_bounds = array<i64: 3>, scalar_prefetch = 0 : i64, scratch_operands = 0 : i64, tpu.core_type = #tpu.core_type<tc>, window_params = [{transform_indices = @transform_0, window_bounds = array<i64: 3, 512>}, {pipeline_mode = #tpu.pipeline_mode<synchronous>, transform_indices = @transform_1, window_bounds = array<i64: 16, 3>}, {pipeline_mode = #tpu.pipeline_mode<synchronous>, transform_indices = @transform_2, window_bounds = array<i64: 16, 1>}, {transform_indices = @transform_3, window_bounds = array<i64: 16, 512>}]} {
    %c0 = arith.constant 0 : index
    %c0_0 = arith.constant 0 : index
    %0 = vector.load %arg2[%c0, %c0_0] : memref<16x3xf32, #tpu.memory_space<vmem>>, vector<16x3xf32>
    %c0_1 = arith.constant 0 : index
    %c0_2 = arith.constant 0 : index
    %1 = vector.load %arg1[%c0_1, %c0_2] : memref<3x512xf32, #tpu.memory_space<vmem>>, vector<3x512xf32>
    %cst = arith.constant dense<0.000000e+00> : vector<16x512xf32>
    %2 = tpu.matmul %0, %1, %cst {dimension_numbers = #tpu.dot_dimension_numbers<[1], [0], [0], [1], [0, 0, 1, 1], [], []>} : vector<16x3xf32>, vector<3x512xf32>, vector<16x512xf32> -> vector<16x512xf32>
    %c0_3 = arith.constant 0 : index
    %c0_4 = arith.constant 0 : index
    %3 = vector.load %arg3[%c0_3, %c0_4] : memref<16x1xf32, #tpu.memory_space<vmem>>, vector<16x1xf32>
    %4 = vector.broadcast %3 : vector<16x1xf32> to vector<16x512xf32>
    %5 = arith.addf %2, %4 : vector<16x512xf32>
    %cst_5 = arith.constant 0.000000e+00 : f32
    %6 = vector.broadcast %cst_5 : f32 to vector<16x512xf32>
    %7 = arith.maximumf %5, %6 : vector<16x512xf32>
    %c0_6 = arith.constant 0 : index
    %c0_7 = arith.constant 0 : index
    %8 = vector.load %arg4[%c0_6, %c0_7] : memref<16x512xf32, #tpu.memory_space<vmem>>, vector<16x512xf32>
    tpu.vector_store %arg4[%c0_6, %c0_7], %7 {strides = array<i32>} : memref<16x512xf32, #tpu.memory_space<vmem>>, vector<16x512xf32>,
    return
  }
  func.func @transform_0(%arg0: i32) -> (i32, i32) {
    %c0_i32 = arith.constant 0 : i32
    %c0_i32_0 = arith.constant 0 : i32
    return %c0_i32, %arg0 : i32, i32
  }
  func.func @transform_1(%arg0: i32) -> (i32, i32) {
    %c0_i32 = arith.constant 0 : i32
    %c0_i32_0 = arith.constant 0 : i32
    %c0_i32_1 = arith.constant 0 : i32
    return %c0_i32, %c0_i32_0 : i32, i32
  }
  func.func @transform_2(%arg0: i32) -> (i32, i32) {
    %c0_i32 = arith.constant 0 : i32
    %c0_i32_0 = arith.constant 0 : i32
    %c0_i32_1 = arith.constant 0 : i32
    return %c0_i32, %c0_i32_0 : i32, i32
  }
  func.func @transform_3(%arg0: i32) -> (i32, i32) {
    %c0_i32 = arith.constant 0 : i32
    %c0_i32_0 = arith.constant 0 : i32
    return %c0_i32, %arg0 : i32, i32
  }
}

</mosaic_0001>

<llo_original>
// kernel: tpu_custom_call.1
$region0: #{tpu_custom_call.1}
  #allocation0 [shape = 'u32[]', space=smem, size = 0x4, offset = 0x4, fixed_abs, tag = 'smem constant byte address 0x4 - core index']
  #allocation1 [shape = 'u32[144,128]{1,0:T(1,128)}', space=vmem, size = 0x12000, scoped, tag = 'internal scratch']
  %s0 = inlined_call_operand.hbm [shape: f32[3,1536], index: 0, kind: input, shape index: {}]
  %s1 = inlined_call_operand.vmem [shape: f32[16,3], index: 1, kind: input, shape index: {}]
  %s2 = inlined_call_operand.vmem [shape: f32[16,1], index: 2, kind: input, shape index: {}]
  %s3 = inlined_call_operand.hbm [shape: f32[16,1536], index: 3, kind: output, shape index: {}]
  %s4 = sld [smem:[#allocation0]]
  $region49: #{tpu_custom_call.1} parent=0
    _
  %s6 = ssub.s32 1, %s4
  %s7 = scalar_select 0, %s6, %s4
  $region1: #{tpu_custom_call.1} parent=0
    #allocation2 [shape = 'u8[16384]{0}', space=vmem, size = 0x4000, scoped, tag = 'input window, operand 0']
    #allocation3 [shape = 's32[2]{0}', space=sflag, size = 0x8, scoped, tag = 'scoped memory for tpu_custom_call.1']
    #allocation4 [shape = 's32[2]{0}', space=sflag, size = 0x8, scoped, tag = 'scoped memory for tpu_custom_call.1']
    #allocation5 [shape = 'u8[65536]{0}', space=vmem, size = 0x10000, scoped, tag = 'output window, operand 0']
    %8 = vsyncpa [#allocation3], 0
    %s9 = scalar_lea.sflag [#allocation3], 1
    %10 = vsyncpa %s9, 0
    %11 = vsyncpa [#allocation4], 0
    %s12 = scalar_lea.sflag [#allocation4], 1
    %13 = vsyncpa %s12, 0
    loop: start=0, step=1, limit=5
    $region2: #{tpu_custom_call.1} parent=1 // loop_pre_header
      _
    $region3: #{tpu_custom_call.1} parent=1 // loop_header
      %s15 = sphi 0, %s19
      %p16 = scmp.ge.s32.totalorder %s15, 5
      %s25 = sphi 0, %s27
      %s28 = sphi 0, %s25
      %s29 = sphi 0, %s28
      %s45 = sphi 0, %s29
      %s49 = sphi 0, %s49
      %s51 = sphi 0, %s49
      %s52 = sphi 0, %s51
      %s66 = sphi 0, %s52
      %s70 = sphi 0, %s70
      %s72 = sphi 0, %s70
      %s73 = sphi 0, %s72
      %s87 = sphi 0, %s73
      %s93 = sphi 0, %s95
      %s96 = sphi 0, %s93
      %s97 = sphi 0, %s96
      %s113 = sphi 0, %s97
    $region4: #{tpu_custom_call.1} parent=1 // loop_header_branch
      %18 = sbr.rel (%p16) target = $region8
    $region5: #{tpu_custom_call.1} parent=1 // loop_body
      %s20 = ssub.s32 %s15, 1
      %s21 = ssub.s32 %s15, 2
      %s22 = sadd.s32 %s15, 1
      %s23 = ssub.s32 %s15, %s22
      %p24 = scmp.eq.s32.totalorder %s23, 0
      %s26 = sadd.s32 %s25, 1
      %s27 = scalar_select %p24, %s25, %s26
      %p30 = pneg %p24
      %p31 = scmp.eq.s32.totalorder %s15, 2
      %p32 = por %p30, %p31
      %p33 = scmp.ne.s32.totalorder %s25, %s28
      %p34 = scmp.eq.s32.totalorder %s15, 0
      %p35 = por %p33, %p34
      %p36 = scmp.ne.s32.totalorder %s25, %s28
      %p37 = scmp.eq.s32.totalorder %s20, 2
      %p38 = por %p36, %p37
      %p39 = scmp.ne.s32.totalorder %s28, %s29
      %p40 = scmp.eq.s32.totalorder %s20, 0
      %p41 = por %p39, %p40
      %p42 = scmp.ne.s32.totalorder %s28, %s29
      %p43 = scmp.eq.s32.totalorder %s21, 2
      %p44 = por %p42, %p43
      %p46 = scmp.ne.s32.totalorder %s29, %s45
      %p47 = scmp.eq.s32.totalorder %s21, 0
      %p48 = por %p46, %p47
      %s50 = sadd.s32 %s49, 1
      %p53 = scmp.eq.s32.totalorder %s15, 2
      %p54 = scmp.ne.s32.totalorder %s49, %s51
      %p55 = scmp.eq.s32.totalorder %s15, 0
      %p56 = por %p54, %p55
      %p57 = scmp.ne.s32.totalorder %s49, %s51
      %p58 = scmp.eq.s32.totalorder %s20, 2
      %p59 = por %p57, %p58
      %p60 = scmp.ne.s32.totalorder %s51, %s52
      %p61 = scmp.eq.s32.totalorder %s20, 0
      %p62 = por %p60, %p61
      %p63 = scmp.ne.s32.totalorder %s51, %s52
      %p64 = scmp.eq.s32.totalorder %s21, 2
      %p65 = por %p63, %p64
      %p67 = scmp.ne.s32.totalorder %s52, %s66
      %p68 = scmp.eq.s32.totalorder %s21, 0
      %p69 = por %p67, %p68
      %s71 = sadd.s32 %s70, 1
      %p74 = scmp.eq.s32.totalorder %s15, 2
      %p75 = scmp.ne.s32.totalorder %s70, %s72
      %p76 = scmp.eq.s32.totalorder %s15, 0
      %p77 = por %p75, %p76
      %p78 = scmp.ne.s32.totalorder %s70, %s72
      %p79 = scmp.eq.s32.totalorder %s20, 2
      %p80 = por %p78, %p79
      %p81 = scmp.ne.s32.totalorder %s72, %s73
      %p82 = scmp.eq.s32.totalorder %s20, 0
      %p83 = por %p81, %p82
      %p84 = scmp.ne.s32.totalorder %s72, %s73
      %p85 = scmp.eq.s32.totalorder %s21, 2
      %p86 = por %p84, %p85
      %p88 = scmp.ne.s32.totalorder %s73, %s87
      %p89 = scmp.eq.s32.totalorder %s21, 0
      %p90 = por %p88, %p89
      %s91 = ssub.s32 %s15, %s22
      %p92 = scmp.eq.s32.totalorder %s91, 0
      %s94 = sadd.s32 %s93, 1
      %s95 = scalar_select %p92, %s93, %s94
      %p98 = pneg %p92
      %p99 = scmp.eq.s32.totalorder %s15, 2
      %p100 = por %p98, %p99
      %p101 = scmp.ne.s32.totalorder %s93, %s96
      %p102 = scmp.eq.s32.totalorder %s15, 0
      %p103 = por %p101, %p102
      %p104 = scmp.ne.s32.totalorder %s93, %s96
      %p105 = scmp.eq.s32.totalorder %s20, 2
      %p106 = por %p104, %p105
      %p107 = scmp.ne.s32.totalorder %s96, %s97
      %p108 = scmp.eq.s32.totalorder %s20, 0
      %p109 = por %p107, %p108
      %p110 = scmp.ne.s32.totalorder %s96, %s97
      %p111 = scmp.eq.s32.totalorder %s21, 2
      %p112 = por %p110, %p111
      %p114 = scmp.ne.s32.totalorder %s97, %s113
      %p115 = scmp.eq.s32.totalorder %s21, 0
      %p116 = por %p114, %p115
      %p117 = scmp.le.s32.totalorder 1, %s15
      %p118 = scmp.lt.s32.totalorder %s15, 4
      %p119 = pnand %p117, %p118
      %p120 = pneg %p119
      // Predicated region
      $region9: #{tpu_custom_call.1} parent=5 // pred_check
        _
      $region10: #{tpu_custom_call.1} parent=5 // pred_check_branch
        %122 = sbr.rel (%p119) target = $region12
      $region11: #{tpu_custom_call.1} parent=5 // pred_region
        %s123 = ssub.s32 %s15, 1
        // Predicated region
        $region13: #{tpu_custom_call.1} parent=11 // pred_check
          %p124 = pneg %p62
        $region14: #{tpu_custom_call.1} parent=11 // pred_check_branch
          %126 = sbr.rel (%p124) target = $region16
        $region15: #{tpu_custom_call.1} parent=11 // pred_region
          _
        $region16: #{tpu_custom_call.1} parent=11 // pred_fallthru
          _
        // Predicated region
        $region17: #{tpu_custom_call.1} parent=11 // pred_check
          %p127 = pneg %p83
        $region18: #{tpu_custom_call.1} parent=11 // pred_check_branch
          %129 = sbr.rel (%p127) target = $region20
        $region19: #{tpu_custom_call.1} parent=11 // pred_region
          _
        $region20: #{tpu_custom_call.1} parent=11 // pred_fallthru
          _
      $region12: #{tpu_custom_call.1} parent=5 // pred_fallthru
        _
      %p130 = scmp.lt.s32.totalorder %s15, 3
      // Predicated region
      $region21: #{tpu_custom_call.1} parent=5 // pred_check
        %p131 = pneg %p130
      $region22: #{tpu_custom_call.1} parent=5 // pred_check_branch
        %133 = sbr.rel (%p131) target = $region24
      $region23: #{tpu_custom_call.1} parent=5 // pred_region
        // Predicated region
        $region25: #{tpu_custom_call.1} parent=23 // pred_check
          %p134 = pneg %p35
        $region26: #{tpu_custom_call.1} parent=23 // pred_check_branch
          %136 = sbr.rel (%p134) target = $region28
        $region27: #{tpu_custom_call.1} parent=23 // pred_region
          %s137 = sand.u32 %s25, 1
          %s138 = scalar_lea.sflag [#allocation3], %s137
          %s139 = sand.u32 %s25, 1
          %s140 = smul.addr %s139, 16
          %s141 = scalar_lea.vmem [#allocation2], %s140
          %s142 = smul.u32 4, %s15
          %s144 = ssub.s32 256, 256
          %145 = vsyncadd %s138, %s144
          %s146 = smul.addr %s142, 64
          %s147 = scalar_lea.hbm %s0, %s146
          %s149 = sshll.u32 %s141, 4
          %s150 = int_to_ptr.vmem [resolvable:$true] %s149
          %152 = dma.hbm_to_vmem [thread:$0]  %s147, 256, %s150, %s138
        $region28: #{tpu_custom_call.1} parent=23 // pred_fallthru
          _
      $region24: #{tpu_custom_call.1} parent=5 // pred_fallthru
        _
      %p153 = scmp.le.s32.totalorder 1, %s15
      %p154 = scmp.lt.s32.totalorder %s15, 4
      %p155 = pnand %p153, %p154
      %p156 = pneg %p155
      // Predicated region
      $region29: #{tpu_custom_call.1} parent=5 // pred_check
        _
      $region30: #{tpu_custom_call.1} parent=5 // pred_check_branch
        %158 = sbr.rel (%p155) target = $region32
      $region31: #{tpu_custom_call.1} parent=5 // pred_region
        %s159 = ssub.s32 %s15, 1
        %s160 = sand.u32 %s28, 1
        %s161 = scalar_lea.sflag [#allocation3], %s160
        %s162 = sand.u32 %s28, 1
        %s163 = smul.addr %s162, 16
        %s164 = scalar_lea.vmem [#allocation2], %s163
        // Predicated region
        $region33: #{tpu_custom_call.1} parent=31 // pred_check
          %p165 = pneg %p41
        $region34: #{tpu_custom_call.1} parent=31 // pred_check_branch
          %167 = sbr.rel (%p165) target = $region36
        $region35: #{tpu_custom_call.1} parent=31 // pred_region
          %168 = dma.done %s161, 256
        $region36: #{tpu_custom_call.1} parent=31 // pred_fallthru
          _
        %s169 = sand.u32 %s28, 1
        %s170 = scalar_lea.sflag [#allocation3], %s169
        %s171 = sand.u32 %s28, 1
        %s172 = smul.addr %s171, 16
        %s173 = scalar_lea.vmem [#allocation2], %s172
        %p174 = pneg %p41
        %p175 = pneg %p38
        %p176 = pneg %p62
        %p177 = pneg %p59
        %p178 = pneg %p83
        %p179 = pneg %p80
        %p180 = pneg %p109
        %p181 = pneg %p106
        %s182 = sand.u32 %s96, 1
        %s183 = scalar_lea.sflag [#allocation4], %s182
        %s184 = sand.u32 %s96, 1
        %s185 = smul.addr %s184, 64
        %s186 = scalar_lea.vmem [#allocation5], %s185
        %s187 = smul.u32 4, %s20
        %s188 = smul.u32 4, %s20
        %v189 = vld [vmem:[%s1] sm:$0xff]
        %v190 = vld [vmem:[%s1 + $0x8] sm:$0xff]
        %v191 = vld [vmem:[%s164] sm:$0x77]
        %v192 = vld [vmem:[%s164 + $0x8] sm:$0x77]
        %v193 = vld [vmem:[%s2] sm:$0xff]
        %v194 = vld [vmem:[%s2 + $0x8] sm:$0xff]
        %196 = vset.pattern.permute.xlu0 0
        %197 = vperm.xlu0 %196, %v193
        %v198 = vpop.permute.xlu0 %197
        %201 = vset.pattern.permute.xlu0 0
        %202 = vperm.xlu0 %201, %v194
        %v203 = vpop.permute.xlu0 %202
        %v207 = vcombine.high %v191, %v191
        %v208 = vcombine.high %v192, %v192
        %vm209 = vcmask 23552
        %v211 = vsel %vm209, %v189, 0
        %v214 = vsel %vm209, %v190, 0
        %vm216 = vcmask 1042432
        %v217 = vsel %vm216, %v191, 0
        %v219 = vsel %vm216, %v207, 0
        %v221 = vsel %vm216, %v192, 0
        %v223 = vsel %vm216, %v208, 0
        %225 = vmatprep.subr.mxu0 0.0
        %226 = vmatpush1.msra.mxu0 0.0
        %227 = vmatprep.subr.mxu0 0.0
        %228 = vmatpush1.msra.mxu0 0.0
        %229 = vmatprep.subr.mxu0 0.0
        %230 = vmatpush1.msra.mxu0 0.0
        %231 = vmatprep.subr.mxu0 0.0
        %232 = vmatpush1.msra.mxu0 0.0
        %233 = vmatprep.subr.mxu0 0.0
        %234 = vmatpush1.msra.mxu0 0.0
        %235 = vmatprep.subr.mxu0 0.0
        %236 = vmatpush1.msra.mxu0 0.0
        %237 = vmatprep.subr.mxu0 0.0
        %238 = vmatpush1.msra.mxu0 0.0
        %239 = vmatprep.subr.mxu0 0.0
        %240 = vmatpush1.msra.mxu0 0.0
        %241 = vmatprep.subr.mxu0 0.0
        %242 = vmatpush1.msra.mxu0 0.0
        %243 = vmatprep.subr.mxu0 0.0
        %244 = vmatpush1.msra.mxu0 0.0
        %245 = vmatprep.subr.mxu0 0.0
        %246 = vmatpush1.msra.mxu0 0.0
        %247 = vmatprep.subr.mxu0 0.0
        %248 = vmatpush1.msra.mxu0 0.0
        %249 = vmatprep.subr.mxu0 0.0
        %250 = vmatpush1.msra.mxu0 0.0
        %251 = vmatprep.subr.mxu0 0.0
        %252 = vmatpush1.msra.mxu0 0.0
        %253 = vmatprep.subr.mxu0 0.0
        %254 = vmatpush1.msra.mxu0 0.0
        %255 = vmatprep.subr.mxu0 %v219
        %256 = vmatpush1.msra.mxu0 %v217
        %257 = vmatprep.subr.mxu0 0.0
        %258 = vmatpush2.msra.mxu0 0.0
        %259 = vmatprep.subr.mxu0 0.0
        %260 = vmatpush2.msra.mxu0 0.0
        %261 = vmatprep.subr.mxu0 0.0
        %262 = vmatpush2.msra.mxu0 0.0
        %263 = vmatprep.subr.mxu0 0.0
        %264 = vmatpush2.msra.mxu0 0.0
        %265 = vmatprep.subr.mxu0 0.0
        %266 = vmatpush2.msra.mxu0 0.0
        %267 = vmatprep.subr.mxu0 0.0
        %268 = vmatpush2.msra.mxu0 0.0
        %269 = vmatprep.subr.mxu0 0.0
        %270 = vmatpush2.msra.mxu0 0.0
        %271 = vmatprep.subr.mxu0 0.0
        %272 = vmatpush2.msra.mxu0 0.0
        %273 = vmatprep.subr.mxu0 0.0
        %274 = vmatpush2.msra.mxu0 0.0
        %275 = vmatprep.subr.mxu0 0.0
        %276 = vmatpush2.msra.mxu0 0.0
        %277 = vmatprep.subr.mxu0 0.0
        %278 = vmatpush2.msra.mxu0 0.0
        %279 = vmatprep.subr.mxu0 0.0
        %280 = vmatpush2.msra.mxu0 0.0
        %281 = vmatprep.subr.mxu0 0.0
        %282 = vmatpush2.msra.mxu0 0.0
        %283 = vmatprep.subr.mxu0 0.0
        %284 = vmatpush2.msra.mxu0 0.0
        %285 = vmatprep.subr.mxu0 0.0
        %286 = vmatpush2.msra.mxu0 0.0
        %287 = vmatprep.subr.mxu0 0.0
        %288 = vmatpush2.msra.mxu0 0.0
        %289 = vmatprep.mubr.f32.mxu0 0.0
        %290 = vmatmul.mubr.f32.gmra.mxu0 %v211
        %v291 = vpop.f32.mrf.mxu0
        %v292 = vadd.f32 %v198, %v291
        %v293 = vpop.f32.mrf.mxu0
        %v294 = vadd.f32 %v198, %v293
        %295 = vmatprep.mubr.f32.mxu0 0.0
        %296 = vmatmul.mubr.f32.gmra.mxu0 %v214
        %v297 = vpop.f32.mrf.mxu0
        %v298 = vadd.f32 %v203, %v297
        %v299 = vpop.f32.mrf.mxu0
        %v300 = vadd.f32 %v203, %v299
        %301 = vdwg.mxu0
        %302 = vmatprep.subr.mxu0 0.0
        %303 = vmatpush1.msra.mxu0 0.0
        %304 = vmatprep.subr.mxu0 0.0
        %305 = vmatpush1.msra.mxu0 0.0
        %306 = vmatprep.subr.mxu0 0.0
        %307 = vmatpush1.msra.mxu0 0.0
        %308 = vmatprep.subr.mxu0 0.0
        %309 = vmatpush1.msra.mxu0 0.0
        %310 = vmatprep.subr.mxu0 0.0
        %311 = vmatpush1.msra.mxu0 0.0
        %312 = vmatprep.subr.mxu0 0.0
        %313 = vmatpush1.msra.mxu0 0.0
        %314 = vmatprep.subr.mxu0 0.0
        %315 = vmatpush1.msra.mxu0 0.0
        %316 = vmatprep.subr.mxu0 0.0
        %317 = vmatpush1.msra.mxu0 0.0
        %318 = vmatprep.subr.mxu0 0.0
        %319 = vmatpush1.msra.mxu0 0.0
        %320 = vmatprep.subr.mxu0 0.0
        %321 = vmatpush1.msra.mxu0 0.0
        %322 = vmatprep.subr.mxu0 0.0
        %323 = vmatpush1.msra.mxu0 0.0
        %324 = vmatprep.subr.mxu0 0.0
        %325 = vmatpush1.msra.mxu0 0.0
        %326 = vmatprep.subr.mxu0 0.0
        %327 = vmatpush1.msra.mxu0 0.0
        %328 = vmatprep.subr.mxu0 0.0
        %329 = vmatpush1.msra.mxu0 0.0
        %330 = vmatprep.subr.mxu0 0.0
        %331 = vmatpush1.msra.mxu0 0.0
        %332 = vmatprep.subr.mxu0 %v223
        %333 = vmatpush1.msra.mxu0 %v221
        %334 = vmatprep.subr.mxu0 0.0
        %335 = vmatpush2.msra.mxu0 0.0
        %336 = vmatprep.subr.mxu0 0.0
        %337 = vmatpush2.msra.mxu0 0.0
        %338 = vmatprep.subr.mxu0 0.0
        %339 = vmatpush2.msra.mxu0 0.0
        %340 = vmatprep.subr.mxu0 0.0
        %341 = vmatpush2.msra.mxu0 0.0
        %342 = vmatprep.subr.mxu0 0.0
        %343 = vmatpush2.msra.mxu0 0.0
        %344 = vmatprep.subr.mxu0 0.0
        %345 = vmatpush2.msra.mxu0 0.0
        %346 = vmatprep.subr.mxu0 0.0
        %347 = vmatpush2.msra.mxu0 0.0
        %348 = vmatprep.subr.mxu0 0.0
        %349 = vmatpush2.msra.mxu0 0.0
        %350 = vmatprep.subr.mxu0 0.0
        %351 = vmatpush2.msra.mxu0 0.0
        %352 = vmatprep.subr.mxu0 0.0
        %353 = vmatpush2.msra.mxu0 0.0
        %354 = vmatprep.subr.mxu0 0.0
        %355 = vmatpush2.msra.mxu0 0.0
        %356 = vmatprep.subr.mxu0 0.0
        %357 = vmatpush2.msra.mxu0 0.0
        %358 = vmatprep.subr.mxu0 0.0
        %359 = vmatpush2.msra.mxu0 0.0
        %360 = vmatprep.subr.mxu0 0.0
        %361 = vmatpush2.msra.mxu0 0.0
        %362 = vmatprep.subr.mxu0 0.0
        %363 = vmatpush2.msra.mxu0 0.0
        %364 = vmatprep.subr.mxu0 0.0
        %365 = vmatpush2.msra.mxu0 0.0
        %366 = vmatprep.mubr.f32.mxu0 0.0
        %367 = vmatmul.mubr.f32.gmra.mxu0 %v211
        %v368 = vpop.f32.mrf.mxu0
        %v369 = vadd.f32 %v198, %v368
        %v370 = vpop.f32.mrf.mxu0
        %v371 = vadd.f32 %v198, %v370
        %372 = vmatprep.mubr.f32.mxu0 0.0
        %373 = vmatmul.mubr.f32.gmra.mxu0 %v214
        %v374 = vpop.f32.mrf.mxu0
        %v375 = vadd.f32 %v203, %v374
        %v376 = vpop.f32.mrf.mxu0
        %v377 = vadd.f32 %v203, %v376
        %378 = vdwg.mxu0
        %v379 = vmax.f32 %v292, 0.0
        %v380 = vmax.f32 %v294, 0.0
        %v381 = vmax.f32 %v369, 0.0
        %v382 = vmax.f32 %v371, 0.0
        %v383 = vmax.f32 %v298, 0.0
        %v384 = vmax.f32 %v300, 0.0
        %v385 = vmax.f32 %v375, 0.0
        %v386 = vmax.f32 %v377, 0.0
        %387 = vst [vmem:[%s186] sm:$0xff] %v379
        %388 = vst [vmem:[%s186 + $0x8] sm:$0xff] %v380
        %389 = vst [vmem:[%s186 + $0x10] sm:$0xff] %v381
        %390 = vst [vmem:[%s186 + $0x18] sm:$0xff] %v382
        %391 = vst [vmem:[%s186 + $0x20] sm:$0xff] %v383
        %392 = vst [vmem:[%s186 + $0x28] sm:$0xff] %v384
        %393 = vst [vmem:[%s186 + $0x30] sm:$0xff] %v385
        %394 = vst [vmem:[%s186 + $0x38] sm:$0xff] %v386
        %s395 = sand.u32 %s96, 1
        %s396 = scalar_lea.sflag [#allocation4], %s395
        %s397 = sand.u32 %s96, 1
        %s398 = smul.addr %s397, 64
        %s399 = scalar_lea.vmem [#allocation5], %s398
        // Predicated region
        $region37: #{tpu_custom_call.1} parent=31 // pred_check
          %p400 = pneg %p106
        $region38: #{tpu_custom_call.1} parent=31 // pred_check_branch
          %402 = sbr.rel (%p400) target = $region40
        $region39: #{tpu_custom_call.1} parent=31 // pred_region
          %s403 = smul.u32 4, %s20
          %s405 = ssub.s32 1024, 1024
          %406 = vsyncadd %s396, %s405
          %s407 = smul.addr %s403, 128
          %s408 = scalar_lea.hbm %s3, %s407
          %s409 = sshll.u32 %s399, 4
          %s410 = int_to_ptr.vmem [resolvable:$true] %s409
          %415 = dma.vmem_to_hbm [thread:$0]  %s410, 1024, %s408, %s396, 512, 1536, 32
        $region40: #{tpu_custom_call.1} parent=31 // pred_fallthru
          _
      $region32: #{tpu_custom_call.1} parent=5 // pred_fallthru
        _
      %p416 = scmp.le.s32.totalorder 2, %s15
      // Predicated region
      $region41: #{tpu_custom_call.1} parent=5 // pred_check
        %p417 = pneg %p416
      $region42: #{tpu_custom_call.1} parent=5 // pred_check_branch
        %419 = sbr.rel (%p417) target = $region44
      $region43: #{tpu_custom_call.1} parent=5 // pred_region
        %s420 = ssub.s32 %s15, 2
        // Predicated region
        $region45: #{tpu_custom_call.1} parent=43 // pred_check
          %p421 = pneg %p112
        $region46: #{tpu_custom_call.1} parent=43 // pred_check_branch
          %423 = sbr.rel (%p421) target = $region48
        $region47: #{tpu_custom_call.1} parent=43 // pred_region
          %s424 = sand.u32 %s97, 1
          %s425 = scalar_lea.sflag [#allocation4], %s424
          %s426 = sand.u32 %s97, 1
          %s427 = smul.addr %s426, 64
          %s428 = scalar_lea.vmem [#allocation5], %s427
          %429 = dma.done %s425, 1024
        $region48: #{tpu_custom_call.1} parent=43 // pred_fallthru
          _
      $region44: #{tpu_custom_call.1} parent=5 // pred_fallthru
        _
    $region6: #{tpu_custom_call.1} parent=1 // loop_footer
      %s19 = sadd.s32 1, %s15
    $region7: #{tpu_custom_call.1} parent=1 // loop_footer_branch
      %14 = sbr.rel target = $region3
    $region8: #{tpu_custom_call.1} parent=1 // loop_exit
      _
    %430 = vsyncpa [#allocation3], 1
    %s431 = scalar_lea.sflag [#allocation3], 1
    %432 = vsyncpa %s431, 1
    %433 = vsyncpa [#allocation4], 1
    %s434 = scalar_lea.sflag [#allocation4], 1
    %435 = vsyncpa %s434, 1

</llo_original>
